<compile_context>
chip_gen: v5e
topology: v5e:2x2
jax: 0.10.0
libtpu: 0.0.40
codegen_flags: <defaults>
</compile_context>

<pallas_src>
import jax
import jax.numpy as jnp
from jax.experimental import pallas as pl
from jax.experimental.pallas import tpu as pltpu


def _round_up(n, m):
    return ((n + m - 1) // m) * m


def nice_coupling_kernel(x_ref, wf1_ref, bf1_ref, wf2_ref, bf2_ref,
                         wg1_ref, bg1_ref, wg2_ref, bg2_ref, y_ref):
    x_in = x_ref[...]                                # (tm, C), x.dtype
    x = x_in.astype(jnp.float32)                     # residual path in f32

    # F (embedded to full row width): zero weight rows for the x1 half.
    h = jnp.dot(x_in.astype(jnp.bfloat16), wf1_ref[...],
                preferred_element_type=jnp.float32) + bf1_ref[...]
    h = jnp.maximum(h, 0.0)
    f = jnp.dot(h.astype(jnp.bfloat16), wf2_ref[...],
                preferred_element_type=jnp.float32) + bf2_ref[...]
    t = x + f                                        # == [y1 | x2]   (f32)

    # G (embedded): zero weight rows for the x2 half / zero cols for y1 half.
    h = jnp.dot(t.astype(jnp.bfloat16), wg1_ref[...],
                preferred_element_type=jnp.float32) + bg1_ref[...]
    h = jnp.maximum(h, 0.0)
    g = jnp.dot(h.astype(jnp.bfloat16), wg2_ref[...],
                preferred_element_type=jnp.float32) + bg2_ref[...]
    y = t + g                                        # == [y1 | y2]   (f32)

    y_ref[...] = y.astype(y_ref.dtype)


def _embed_weights(params, C, split1):
    """Embed F/G into full-width matrices; zero rows/cols keep the math exact."""
    f32 = jnp.float32
    wf1, bf1 = params["wf1"].astype(f32), params["bf1"].astype(f32)
    wf2, bf2 = params["wf2"].astype(f32), params["bf2"].astype(f32)
    wg1, bg1 = params["wg1"].astype(f32), params["bg1"].astype(f32)
    wg2, bg2 = params["wg2"].astype(f32), params["bg2"].astype(f32)
    hf, hg = wf1.shape[1], wg1.shape[1]
    Hf, Hg = _round_up(hf, 128), _round_up(hg, 128)   # pad hidden dims only

    Wf1 = jnp.zeros((C, Hf), f32).at[split1:, :hf].set(wf1)
    Bf1 = jnp.zeros((1, Hf), f32).at[:, :hf].set(bf1)
    Wf2 = jnp.zeros((Hf, C), f32).at[:hf, :split1].set(wf2)
    Bf2 = jnp.zeros((1, C), f32).at[:, :split1].set(bf2)
    Wg1 = jnp.zeros((C, Hg), f32).at[:split1, :hg].set(wg1)
    Bg1 = jnp.zeros((1, Hg), f32).at[:, :hg].set(bg1)
    Wg2 = jnp.zeros((Hg, C), f32).at[:hg, split1:].set(wg2)
    Bg2 = jnp.zeros((1, C), f32).at[:, split1:].set(bg2)

    bf16 = jnp.bfloat16
    return (Wf1.astype(bf16), Bf1, Wf2.astype(bf16), Bf2,
            Wg1.astype(bf16), Bg1, Wg2.astype(bf16), Bg2)


def nice_coupling_block(x, params, *, tile_rows=1024,
                        vmem_budget_bytes=48 * 1024 * 1024):
    """x: (B, S, C) float32 or bfloat16. params: F/G weights (PyTorch shapes).
    Returns (B, S, C) in x.dtype."""
    B, S, C = x.shape
    split1 = C // 2
    N = B * S

    weights = _embed_weights(params, C, split1)
    Hf = weights[0].shape[1]
    Hg = weights[4].shape[1]
    weight_bytes = sum(int(w.size) * w.dtype.itemsize for w in weights)
    act_bytes = x.dtype.itemsize            # input and output stream in x.dtype

    # --- row tile selection -------------------------------------------------
    # Double-buffered input + output row tiles must fit the VMEM budget.
    # (Worst case assumes weights are also double-buffered even though their
    #  block index never changes; a pl.Buffered(1) pipeline_mode on the weight
    #  specs would reclaim ~half of that footprint on v7x if ever needed.)
    per_row = 2 * C * (act_bytes + act_bytes)            # in + out, 2 buffers
    avail = max(vmem_budget_bytes - 2 * weight_bytes - (2 << 20), 8 * per_row)
    tm_cap = max(8, (avail // per_row) // 8 * 8)
    tm = max(8, min(_round_up(tile_rows, 8), tm_cap))

    # >= 2 grid steps when rows allow (v7x megacore sharding of the "parallel"
    # axis); keep row overhang small. The ragged last block is masked by
    # Pallas, so the wrapper never pads rows.
    steps = pl.cdiv(N, tm)
    if steps == 1 and N >= 16:
        steps = 2
    tm = min(tm, _round_up(pl.cdiv(N, steps), 8))
    steps = pl.cdiv(N, tm)

    vmem_needed = 2 * tm * C * 2 * act_bytes + 2 * weight_bytes
    vmem_limit = int(min(max(vmem_needed + (16 << 20), 32 << 20), 64 << 20))

    x2d = x.reshape(N, C)                   # free metadata reshape, no HBM pass
    full = lambda shape: pl.BlockSpec(shape, lambda i: (0, 0))

    y2d = pl.pallas_call(
        nice_coupling_kernel,
        out_shape=jax.ShapeDtypeStruct((N, C), x.dtype),
        grid_spec=pltpu.PrefetchScalarGridSpec(
            num_scalar_prefetch=0,
            grid=(steps,),
            in_specs=[
                pl.BlockSpec((tm, C), lambda i: (i, 0)),   # x rows, true width
                full((C, Hf)), full((1, Hf)),              # F layer 1 (embedded)
                full((Hf, C)), full((1, C)),               # F layer 2 (embedded)
                full((C, Hg)), full((1, Hg)),              # G layer 1 (embedded)
                full((Hg, C)), full((1, C)),               # G layer 2 (embedded)
            ],
            out_specs=pl.BlockSpec((tm, C), lambda i: (i, 0)),  # [y1 | y2] rows
        ),
        compiler_params=pltpu.CompilerParams(
            dimension_semantics=("parallel",),
            vmem_limit_bytes=vmem_limit,
        ),
    )(x2d, *weights)

    return y2d.reshape(B, S, C)


def init_params(key, channels, reduction_factor=2):
    """Deterministic synthetic init matching the PyTorch module's shapes."""
    split1 = channels // 2
    split2 = channels - split1
    hf = int(split2 // reduction_factor)
    hg = int(split1 // reduction_factor)
    ks = jax.random.split(key, 8)
    scale = 0.1
    return {
        # F: Linear(split2 -> hf) -> ReLU -> Linear(hf -> split1)
        "wf1": scale * jax.random.normal(ks[0], (split2, hf), jnp.float32),
        "bf1": scale * jax.random.normal(ks[1], (1, hf), jnp.float32),
        "wf2": scale * jax.random.normal(ks[2], (hf, split1), jnp.float32),
        "bf2": scale * jax.random.normal(ks[3], (1, split1), jnp.float32),
        # G: Linear(split1 -> hg) -> ReLU -> Linear(hg -> split2)
        "wg1": scale * jax.random.normal(ks[4], (split1, hg), jnp.float32),
        "bg1": scale * jax.random.normal(ks[5], (1, hg), jnp.float32),
        "wg2": scale * jax.random.normal(ks[6], (hg, split2), jnp.float32),
        "bg2": scale * jax.random.normal(ks[7], (1, split2), jnp.float32),
    }


def reference_forward(x, params):
    """Pure-JAX f32 reference of the PyTorch forward (rev=False, no conditions)."""
    C = x.shape[-1]
    split1 = C // 2
    x1, x2 = x[..., :split1], x[..., split1:]
    relu = lambda v: jnp.maximum(v, 0.0)
    f = relu(x2 @ params["wf1"] + params["bf1"][0]) @ params["wf2"] + params["bf2"][0]
    y1 = x1 + f
    g = relu(y1 @ params["wg1"] + params["bg1"][0]) @ params["wg2"] + params["bg2"][0]
    y2 = x2 + g
    return jnp.concatenate([y1, y2], axis=-1)


if __name__ == "__main__":
    B, S, C = 2, 8, 32          # batch, sequence, channels (channels-last layout)
    key = jax.random.PRNGKey(0)
    kx, kp = jax.random.split(key)
    x = jax.random.normal(kx, (B, S, C), jnp.float32)
    params = init_params(kp, C, reduction_factor=2)

    out = jax.block_until_ready(nice_coupling_block(x, params))

    ref = reference_forward(x, params)
    assert out.shape == (B, S, C)
    # bf16 MXU operands with f32 accumulation -> loosen tolerance vs pure-f32 ref.
    assert jnp.allclose(out, ref, atol=2e-2, rtol=2e-2), "mismatch vs reference"
    print("KERNEL_OK")
</pallas_src>

<mosaic_0001>
module attributes {stable_mosaic.version = 11 : i64} {
  func.func @nice_coupling_kernel(%arg0: i32, %arg1: memref<8x32xf32, #tpu.memory_space<vmem>>, %arg2: memref<32x128xbf16, #tpu.memory_space<vmem>>, %arg3: memref<1x128xf32, #tpu.memory_space<vmem>>, %arg4: memref<128x32xbf16, #tpu.memory_space<vmem>>, %arg5: memref<1x32xf32, #tpu.memory_space<vmem>>, %arg6: memref<32x128xbf16, #tpu.memory_space<vmem>>, %arg7: memref<1x128xf32, #tpu.memory_space<vmem>>, %arg8: memref<128x32xbf16, #tpu.memory_space<vmem>>, %arg9: memref<1x32xf32, #tpu.memory_space<vmem>>, %arg10: memref<8x32xf32, #tpu.memory_space<vmem>>) attributes {dimension_semantics = [#tpu.dimension_semantics<parallel>], iteration_bounds = array<i64: 2>, scalar_prefetch = 0 : i64, scratch_operands = 0 : i64, tpu.core_type = #tpu.core_type<tc>, window_params = [{transform_indices = @transform_0, window_bounds = array<i64: 8, 32>}, {pipeline_mode = #tpu.pipeline_mode<synchronous>, transform_indices = @transform_1, window_bounds = array<i64: 32, 128>}, {pipeline_mode = #tpu.pipeline_mode<synchronous>, transform_indices = @transform_2, window_bounds = array<i64: 1, 128>}, {pipeline_mode = #tpu.pipeline_mode<synchronous>, transform_indices = @transform_3, window_bounds = array<i64: 128, 32>}, {pipeline_mode = #tpu.pipeline_mode<synchronous>, transform_indices = @transform_4, window_bounds = array<i64: 1, 32>}, {pipeline_mode = #tpu.pipeline_mode<synchronous>, transform_indices = @transform_5, window_bounds = array<i64: 32, 128>}, {pipeline_mode = #tpu.pipeline_mode<synchronous>, transform_indices = @transform_6, window_bounds = array<i64: 1, 128>}, {pipeline_mode = #tpu.pipeline_mode<synchronous>, transform_indices = @transform_7, window_bounds = array<i64: 128, 32>}, {pipeline_mode = #tpu.pipeline_mode<synchronous>, transform_indices = @transform_8, window_bounds = array<i64: 1, 32>}, {transform_indices = @transform_9, window_bounds = array<i64: 8, 32>}]} {
    %c0 = arith.constant 0 : index
    %c0_0 = arith.constant 0 : index
    %0 = vector.load %arg1[%c0, %c0_0] : memref<8x32xf32, #tpu.memory_space<vmem>>, vector<8x32xf32>
    %1 = arith.truncf %0 : vector<8x32xf32> to vector<8x32xbf16>
    %c0_1 = arith.constant 0 : index
    %c0_2 = arith.constant 0 : index
    %2 = vector.load %arg2[%c0_1, %c0_2] : memref<32x128xbf16, #tpu.memory_space<vmem>>, vector<32x128xbf16>
    %cst = arith.constant dense<0.000000e+00> : vector<8x128xf32>
    %3 = tpu.matmul %1, %2, %cst {dimension_numbers = #tpu.dot_dimension_numbers<[1], [0], [0], [1], [0, 0, 1, 1], [], []>} : vector<8x32xbf16>, vector<32x128xbf16>, vector<8x128xf32> -> vector<8x128xf32>
    %c0_3 = arith.constant 0 : index
    %c0_4 = arith.constant 0 : index
    %4 = vector.load %arg3[%c0_3, %c0_4] : memref<1x128xf32, #tpu.memory_space<vmem>>, vector<1x128xf32>
    %5 = vector.broadcast %4 : vector<1x128xf32> to vector<8x128xf32>
    %6 = arith.addf %3, %5 : vector<8x128xf32>
    %cst_5 = arith.constant 0.000000e+00 : f32
    %7 = vector.broadcast %cst_5 : f32 to vector<8x128xf32>
    %8 = arith.maximumf %6, %7 : vector<8x128xf32>
    %9 = arith.truncf %8 : vector<8x128xf32> to vector<8x128xbf16>
    %c0_6 = arith.constant 0 : index
    %c0_7 = arith.constant 0 : index
    %10 = vector.load %arg4[%c0_6, %c0_7] : memref<128x32xbf16, #tpu.memory_space<vmem>>, vector<128x32xbf16>
    %cst_8 = arith.constant dense<0.000000e+00> : vector<8x32xf32>
    %11 = tpu.matmul %9, %10, %cst_8 {dimension_numbers = #tpu.dot_dimension_numbers<[1], [0], [0], [1], [0, 0, 1, 1], [], []>} : vector<8x128xbf16>, vector<128x32xbf16>, vector<8x32xf32> -> vector<8x32xf32>
    %c0_9 = arith.constant 0 : index
    %c0_10 = arith.constant 0 : index
    %12 = vector.load %arg5[%c0_9, %c0_10] : memref<1x32xf32, #tpu.memory_space<vmem>>, vector<1x32xf32>
    %13 = vector.broadcast %12 : vector<1x32xf32> to vector<8x32xf32>
    %14 = arith.addf %11, %13 : vector<8x32xf32>
    %15 = arith.addf %0, %14 : vector<8x32xf32>
    %16 = arith.truncf %15 : vector<8x32xf32> to vector<8x32xbf16>
    %c0_11 = arith.constant 0 : index
    %c0_12 = arith.constant 0 : index
    %17 = vector.load %arg6[%c0_11, %c0_12] : memref<32x128xbf16, #tpu.memory_space<vmem>>, vector<32x128xbf16>
    %cst_13 = arith.constant dense<0.000000e+00> : vector<8x128xf32>
    %18 = tpu.matmul %16, %17, %cst_13 {dimension_numbers = #tpu.dot_dimension_numbers<[1], [0], [0], [1], [0, 0, 1, 1], [], []>} : vector<8x32xbf16>, vector<32x128xbf16>, vector<8x128xf32> -> vector<8x128xf32>
    %c0_14 = arith.constant 0 : index
    %c0_15 = arith.constant 0 : index
    %19 = vector.load %arg7[%c0_14, %c0_15] : memref<1x128xf32, #tpu.memory_space<vmem>>, vector<1x128xf32>
    %20 = vector.broadcast %19 : vector<1x128xf32> to vector<8x128xf32>
    %21 = arith.addf %18, %20 : vector<8x128xf32>
    %cst_16 = arith.constant 0.000000e+00 : f32
    %22 = vector.broadcast %cst_16 : f32 to vector<8x128xf32>
    %23 = arith.maximumf %21, %22 : vector<8x128xf32>
    %24 = arith.truncf %23 : vector<8x128xf32> to vector<8x128xbf16>
    %c0_17 = arith.constant 0 : index
    %c0_18 = arith.constant 0 : index
    %25 = vector.load %arg8[%c0_17, %c0_18] : memref<128x32xbf16, #tpu.memory_space<vmem>>, vector<128x32xbf16>
    %cst_19 = arith.constant dense<0.000000e+00> : vector<8x32xf32>
    %26 = tpu.matmul %24, %25, %cst_19 {dimension_numbers = #tpu.dot_dimension_numbers<[1], [0], [0], [1], [0, 0, 1, 1], [], []>} : vector<8x128xbf16>, vector<128x32xbf16>, vector<8x32xf32> -> vector<8x32xf32>
    %c0_20 = arith.constant 0 : index
    %c0_21 = arith.constant 0 : index
    %27 = vector.load %arg9[%c0_20, %c0_21] : memref<1x32xf32, #tpu.memory_space<vmem>>, vector<1x32xf32>
    %28 = vector.broadcast %27 : vector<1x32xf32> to vector<8x32xf32>
    %29 = arith.addf %26, %28 : vector<8x32xf32>
    %30 = arith.addf %15, %29 : vector<8x32xf32>
    %c0_22 = arith.constant 0 : index
    %c0_23 = arith.constant 0 : index
    %31 = vector.load %arg10[%c0_22, %c0_23] : memref<8x32xf32, #tpu.memory_space<vmem>>, vector<8x32xf32>
    tpu.vector_store %arg10[%c0_22, %c0_23], %30 {strides = array<i32>} : memref<8x32xf32, #tpu.memory_space<vmem>>, vector<8x32xf32>,
    return
  }
  func.func @transform_0(%arg0: i32) -> (i32, i32) {
    %c0_i32 = arith.constant 0 : i32
    %c0_i32_0 = arith.constant 0 : i32
    return %arg0, %c0_i32 : i32, i32
  }
  func.func @transform_1(%arg0: i32) -> (i32, i32) {
    %c0_i32 = arith.constant 0 : i32
    %c0_i32_0 = arith.constant 0 : i32
    %c0_i32_1 = arith.constant 0 : i32
    return %c0_i32, %c0_i32_0 : i32, i32
  }
  func.func @transform_2(%arg0: i32) -> (i32, i32) {
    %c0_i32 = arith.constant 0 : i32
    %c0_i32_0 = arith.constant 0 : i32
    %c0_i32_1 = arith.constant 0 : i32
    return %c0_i32, %c0_i32_0 : i32, i32
  }
  func.func @transform_3(%arg0: i32) -> (i32, i32) {
    %c0_i32 = arith.constant 0 : i32
    %c0_i32_0 = arith.constant 0 : i32
    %c0_i32_1 = arith.constant 0 : i32
    return %c0_i32, %c0_i32_0 : i32, i32
  }
  func.func @transform_4(%arg0: i32) -> (i32, i32) {
    %c0_i32 = arith.constant 0 : i32
    %c0_i32_0 = arith.constant 0 : i32
    %c0_i32_1 = arith.constant 0 : i32
    return %c0_i32, %c0_i32_0 : i32, i32
  }
  func.func @transform_5(%arg0: i32) -> (i32, i32) {
    %c0_i32 = arith.constant 0 : i32
    %c0_i32_0 = arith.constant 0 : i32
    %c0_i32_1 = arith.constant 0 : i32
    return %c0_i32, %c0_i32_0 : i32, i32
  }
  func.func @transform_6(%arg0: i32) -> (i32, i32) {
    %c0_i32 = arith.constant 0 : i32
    %c0_i32_0 = arith.constant 0 : i32
    %c0_i32_1 = arith.constant 0 : i32
    return %c0_i32, %c0_i32_0 : i32, i32
  }
  func.func @transform_7(%arg0: i32) -> (i32, i32) {
    %c0_i32 = arith.constant 0 : i32
    %c0_i32_0 = arith.constant 0 : i32
    %c0_i32_1 = arith.constant 0 : i32
    return %c0_i32, %c0_i32_0 : i32, i32
  }
  func.func @transform_8(%arg0: i32) -> (i32, i32) {
    %c0_i32 = arith.constant 0 : i32
    %c0_i32_0 = arith.constant 0 : i32
    %c0_i32_1 = arith.constant 0 : i32
    return %c0_i32, %c0_i32_0 : i32, i32
  }
  func.func @transform_9(%arg0: i32) -> (i32, i32) {
    %c0_i32 = arith.constant 0 : i32
    %c0_i32_0 = arith.constant 0 : i32
    return %arg0, %c0_i32 : i32, i32
  }
}

</mosaic_0001>

<llo_original>
// kernel: tpu_custom_call.1
$region0: #{tpu_custom_call.1}
  #allocation0 [shape = 'u32[]', space=smem, size = 0x4, offset = 0x4, fixed_abs, tag = 'smem constant byte address 0x4 - core index']
  #allocation1 [shape = 'u32[72,128]{1,0:T(1,128)}', space=vmem, size = 0x9000, scoped, tag = 'internal scratch']
  %s0 = inlined_call_operand.vmem [shape: f32[16,32], index: 0, kind: input, shape index: {}]
  %s1 = inlined_call_operand.vmem [shape: bf16[32,128], index: 1, kind: input, shape index: {}]
  %s2 = inlined_call_operand.vmem [shape: f32[1,128], index: 2, kind: input, shape index: {}]
  %s3 = inlined_call_operand.vmem [shape: bf16[128,32], index: 3, kind: input, shape index: {}]
  %s4 = inlined_call_operand.vmem [shape: f32[1,32], index: 4, kind: input, shape index: {}]
  %s5 = inlined_call_operand.vmem [shape: bf16[32,128], index: 5, kind: input, shape index: {}]
  %s6 = inlined_call_operand.vmem [shape: f32[1,128], index: 6, kind: input, shape index: {}]
  %s7 = inlined_call_operand.vmem [shape: bf16[128,32], index: 7, kind: input, shape index: {}]
  %s8 = inlined_call_operand.vmem [shape: f32[1,32], index: 8, kind: input, shape index: {}]
  %s9 = inlined_call_operand.hbm [shape: f32[16,32], index: 9, kind: output, shape index: {}]
  %s10 = sld [smem:[#allocation0]]
  $region69: #{tpu_custom_call.1} parent=0
    _
  %s12 = ssub.s32 1, %s10
  %s13 = scalar_select 0, %s12, %s10
  $region1: #{tpu_custom_call.1} parent=0
    #allocation2 [shape = 'u8[8192]{0}', space=vmem, size = 0x2000, scoped, tag = 'output window, operand 0']
    #allocation3 [shape = 's32[2]{0}', space=sflag, size = 0x8, scoped, tag = 'scoped memory for tpu_custom_call.1']
    %14 = vsyncpa [#allocation3], 0
    %s15 = scalar_lea.sflag [#allocation3], 1
    %16 = vsyncpa %s15, 0
    loop: start=0, step=1, limit=4
    $region2: #{tpu_custom_call.1} parent=1 // loop_pre_header
      _
    $region3: #{tpu_custom_call.1} parent=1 // loop_header
      %s18 = sphi 0, %s22
      %p19 = scmp.ge.s32.totalorder %s18, 4
      %s28 = sphi 0, %s30
      %s31 = sphi 0, %s28
      %s32 = sphi 0, %s31
      %s48 = sphi 0, %s32
      %s52 = sphi 0, %s52
      %s54 = sphi 0, %s52
      %s55 = sphi 0, %s54
      %s69 = sphi 0, %s55
      %s73 = sphi 0, %s73
      %s75 = sphi 0, %s73
      %s76 = sphi 0, %s75
      %s90 = sphi 0, %s76
      %s94 = sphi 0, %s94
      %s96 = sphi 0, %s94
      %s97 = sphi 0, %s96
      %s111 = sphi 0, %s97
      %s115 = sphi 0, %s115
      %s117 = sphi 0, %s115
      %s118 = sphi 0, %s117
      %s132 = sphi 0, %s118
      %s136 = sphi 0, %s136
      %s138 = sphi 0, %s136
      %s139 = sphi 0, %s138
      %s153 = sphi 0, %s139
      %s157 = sphi 0, %s157
      %s159 = sphi 0, %s157
      %s160 = sphi 0, %s159
      %s174 = sphi 0, %s160
      %s178 = sphi 0, %s178
      %s180 = sphi 0, %s178
      %s181 = sphi 0, %s180
      %s195 = sphi 0, %s181
      %s199 = sphi 0, %s199
      %s201 = sphi 0, %s199
      %s202 = sphi 0, %s201
      %s216 = sphi 0, %s202
      %s222 = sphi 0, %s224
      %s225 = sphi 0, %s222
      %s226 = sphi 0, %s225
      %s242 = sphi 0, %s226
    $region4: #{tpu_custom_call.1} parent=1 // loop_header_branch
      %21 = sbr.rel (%p19) target = $region8
    $region5: #{tpu_custom_call.1} parent=1 // loop_body
      %s23 = ssub.s32 %s18, 1
      %s24 = ssub.s32 %s18, 2
      %s25 = sadd.s32 %s18, 1
      %s26 = ssub.s32 %s18, %s25
      %p27 = scmp.eq.s32.totalorder %s26, 0
      %s29 = sadd.s32 %s28, 1
      %s30 = scalar_select %p27, %s28, %s29
      %p33 = pneg %p27
      %p34 = scmp.eq.s32.totalorder %s18, 1
      %p35 = por %p33, %p34
      %p36 = scmp.ne.s32.totalorder %s28, %s31
      %p37 = scmp.eq.s32.totalorder %s18, 0
      %p38 = por %p36, %p37
      %p39 = scmp.ne.s32.totalorder %s28, %s31
      %p40 = scmp.eq.s32.totalorder %s23, 1
      %p41 = por %p39, %p40
      %p42 = scmp.ne.s32.totalorder %s31, %s32
      %p43 = scmp.eq.s32.totalorder %s23, 0
      %p44 = por %p42, %p43
      %p45 = scmp.ne.s32.totalorder %s31, %s32
      %p46 = scmp.eq.s32.totalorder %s24, 1
      %p47 = por %p45, %p46
      %p49 = scmp.ne.s32.totalorder %s32, %s48
      %p50 = scmp.eq.s32.totalorder %s24, 0
      %p51 = por %p49, %p50
      %s53 = sadd.s32 %s52, 1
      %p56 = scmp.eq.s32.totalorder %s18, 1
      %p57 = scmp.ne.s32.totalorder %s52, %s54
      %p58 = scmp.eq.s32.totalorder %s18, 0
      %p59 = por %p57, %p58
      %p60 = scmp.ne.s32.totalorder %s52, %s54
      %p61 = scmp.eq.s32.totalorder %s23, 1
      %p62 = por %p60, %p61
      %p63 = scmp.ne.s32.totalorder %s54, %s55
      %p64 = scmp.eq.s32.totalorder %s23, 0
      %p65 = por %p63, %p64
      %p66 = scmp.ne.s32.totalorder %s54, %s55
      %p67 = scmp.eq.s32.totalorder %s24, 1
      %p68 = por %p66, %p67
      %p70 = scmp.ne.s32.totalorder %s55, %s69
      %p71 = scmp.eq.s32.totalorder %s24, 0
      %p72 = por %p70, %p71
      %s74 = sadd.s32 %s73, 1
      %p77 = scmp.eq.s32.totalorder %s18, 1
      %p78 = scmp.ne.s32.totalorder %s73, %s75
      %p79 = scmp.eq.s32.totalorder %s18, 0
      %p80 = por %p78, %p79
      %p81 = scmp.ne.s32.totalorder %s73, %s75
      %p82 = scmp.eq.s32.totalorder %s23, 1
      %p83 = por %p81, %p82
      %p84 = scmp.ne.s32.totalorder %s75, %s76
      %p85 = scmp.eq.s32.totalorder %s23, 0
      %p86 = por %p84, %p85
      %p87 = scmp.ne.s32.totalorder %s75, %s76
      %p88 = scmp.eq.s32.totalorder %s24, 1
      %p89 = por %p87, %p88
      %p91 = scmp.ne.s32.totalorder %s76, %s90
      %p92 = scmp.eq.s32.totalorder %s24, 0
      %p93 = por %p91, %p92
      %s95 = sadd.s32 %s94, 1
      %p98 = scmp.eq.s32.totalorder %s18, 1
      %p99 = scmp.ne.s32.totalorder %s94, %s96
      %p100 = scmp.eq.s32.totalorder %s18, 0
      %p101 = por %p99, %p100
      %p102 = scmp.ne.s32.totalorder %s94, %s96
      %p103 = scmp.eq.s32.totalorder %s23, 1
      %p104 = por %p102, %p103
      %p105 = scmp.ne.s32.totalorder %s96, %s97
      %p106 = scmp.eq.s32.totalorder %s23, 0
      %p107 = por %p105, %p106
      %p108 = scmp.ne.s32.totalorder %s96, %s97
      %p109 = scmp.eq.s32.totalorder %s24, 1
      %p110 = por %p108, %p109
      %p112 = scmp.ne.s32.totalorder %s97, %s111
      %p113 = scmp.eq.s32.totalorder %s24, 0
      %p114 = por %p112, %p113
      %s116 = sadd.s32 %s115, 1
      %p119 = scmp.eq.s32.totalorder %s18, 1
      %p120 = scmp.ne.s32.totalorder %s115, %s117
      %p121 = scmp.eq.s32.totalorder %s18, 0
      %p122 = por %p120, %p121
      %p123 = scmp.ne.s32.totalorder %s115, %s117
      %p124 = scmp.eq.s32.totalorder %s23, 1
      %p125 = por %p123, %p124
      %p126 = scmp.ne.s32.totalorder %s117, %s118
      %p127 = scmp.eq.s32.totalorder %s23, 0
      %p128 = por %p126, %p127
      %p129 = scmp.ne.s32.totalorder %s117, %s118
      %p130 = scmp.eq.s32.totalorder %s24, 1
      %p131 = por %p129, %p130
      %p133 = scmp.ne.s32.totalorder %s118, %s132
      %p134 = scmp.eq.s32.totalorder %s24, 0
      %p135 = por %p133, %p134
      %s137 = sadd.s32 %s136, 1
      %p140 = scmp.eq.s32.totalorder %s18, 1
      %p141 = scmp.ne.s32.totalorder %s136, %s138
      %p142 = scmp.eq.s32.totalorder %s18, 0
      %p143 = por %p141, %p142
      %p144 = scmp.ne.s32.totalorder %s136, %s138
      %p145 = scmp.eq.s32.totalorder %s23, 1
      %p146 = por %p144, %p145
      %p147 = scmp.ne.s32.totalorder %s138, %s139
      %p148 = scmp.eq.s32.totalorder %s23, 0
      %p149 = por %p147, %p148
      %p150 = scmp.ne.s32.totalorder %s138, %s139
      %p151 = scmp.eq.s32.totalorder %s24, 1
      %p152 = por %p150, %p151
      %p154 = scmp.ne.s32.totalorder %s139, %s153
      %p155 = scmp.eq.s32.totalorder %s24, 0
      %p156 = por %p154, %p155
      %s158 = sadd.s32 %s157, 1
      %p161 = scmp.eq.s32.totalorder %s18, 1
      %p162 = scmp.ne.s32.totalorder %s157, %s159
      %p163 = scmp.eq.s32.totalorder %s18, 0
      %p164 = por %p162, %p163
      %p165 = scmp.ne.s32.totalorder %s157, %s159
      %p166 = scmp.eq.s32.totalorder %s23, 1
      %p167 = por %p165, %p166
      %p168 = scmp.ne.s32.totalorder %s159, %s160
      %p169 = scmp.eq.s32.totalorder %s23, 0
      %p170 = por %p168, %p169
      %p171 = scmp.ne.s32.totalorder %s159, %s160
      %p172 = scmp.eq.s32.totalorder %s24, 1
      %p173 = por %p171, %p172
      %p175 = scmp.ne.s32.totalorder %s160, %s174
      %p176 = scmp.eq.s32.totalorder %s24, 0
      %p177 = por %p175, %p176
      %s179 = sadd.s32 %s178, 1
      %p182 = scmp.eq.s32.totalorder %s18, 1
      %p183 = scmp.ne.s32.totalorder %s178, %s180
      %p184 = scmp.eq.s32.totalorder %s18, 0
      %p185 = por %p183, %p184
      %p186 = scmp.ne.s32.totalorder %s178, %s180
      %p187 = scmp.eq.s32.totalorder %s23, 1
      %p188 = por %p186, %p187
      %p189 = scmp.ne.s32.totalorder %s180, %s181
      %p190 = scmp.eq.s32.totalorder %s23, 0
      %p191 = por %p189, %p190
      %p192 = scmp.ne.s32.totalorder %s180, %s181
      %p193 = scmp.eq.s32.totalorder %s24, 1
      %p194 = por %p192, %p193
      %p196 = scmp.ne.s32.totalorder %s181, %s195
      %p197 = scmp.eq.s32.totalorder %s24, 0
      %p198 = por %p196, %p197
      %s200 = sadd.s32 %s199, 1
      %p203 = scmp.eq.s32.totalorder %s18, 1
      %p204 = scmp.ne.s32.totalorder %s199, %s201
      %p205 = scmp.eq.s32.totalorder %s18, 0
      %p206 = por %p204, %p205
      %p207 = scmp.ne.s32.totalorder %s199, %s201
      %p208 = scmp.eq.s32.totalorder %s23, 1
      %p209 = por %p207, %p208
      %p210 = scmp.ne.s32.totalorder %s201, %s202
      %p211 = scmp.eq.s32.totalorder %s23, 0
      %p212 = por %p210, %p211
      %p213 = scmp.ne.s32.totalorder %s201, %s202
      %p214 = scmp.eq.s32.totalorder %s24, 1
      %p215 = por %p213, %p214
      %p217 = scmp.ne.s32.totalorder %s202, %s216
      %p218 = scmp.eq.s32.totalorder %s24, 0
      %p219 = por %p217, %p218
      %s220 = ssub.s32 %s18, %s25
      %p221 = scmp.eq.s32.totalorder %s220, 0
      %s223 = sadd.s32 %s222, 1
      %s224 = scalar_select %p221, %s222, %s223
      %p227 = pneg %p221
      %p228 = scmp.eq.s32.totalorder %s18, 1
      %p229 = por %p227, %p228
      %p230 = scmp.ne.s32.totalorder %s222, %s225
      %p231 = scmp.eq.s32.totalorder %s18, 0
      %p232 = por %p230, %p231
      %p233 = scmp.ne.s32.totalorder %s222, %s225
      %p234 = scmp.eq.s32.totalorder %s23, 1
      %p235 = por %p233, %p234
      %p236 = scmp.ne.s32.totalorder %s225, %s226
      %p237 = scmp.eq.s32.totalorder %s23, 0
      %p238 = por %p236, %p237
      %p239 = scmp.ne.s32.totalorder %s225, %s226
      %p240 = scmp.eq.s32.totalorder %s24, 1
      %p241 = por %p239, %p240
      %p243 = scmp.ne.s32.totalorder %s226, %s242
      %p244 = scmp.eq.s32.totalorder %s24, 0
      %p245 = por %p243, %p244
      %p246 = scmp.le.s32.totalorder 1, %s18
      %p247 = scmp.lt.s32.totalorder %s18, 3
      %p248 = pnand %p246, %p247
      %p249 = pneg %p248
      // Predicated region
      $region9: #{tpu_custom_call.1} parent=5 // pred_check
        _
      $region10: #{tpu_custom_call.1} parent=5 // pred_check_branch
        %251 = sbr.rel (%p248) target = $region12
      $region11: #{tpu_custom_call.1} parent=5 // pred_region
        %s252 = ssub.s32 %s18, 1
        // Predicated region
        $region13: #{tpu_custom_call.1} parent=11 // pred_check
          %p253 = pneg %p65
        $region14: #{tpu_custom_call.1} parent=11 // pred_check_branch
          %255 = sbr.rel (%p253) target = $region16
        $region15: #{tpu_custom_call.1} parent=11 // pred_region
          _
        $region16: #{tpu_custom_call.1} parent=11 // pred_fallthru
          _
        // Predicated region
        $region17: #{tpu_custom_call.1} parent=11 // pred_check
          %p256 = pneg %p86
        $region18: #{tpu_custom_call.1} parent=11 // pred_check_branch
          %258 = sbr.rel (%p256) target = $region20
        $region19: #{tpu_custom_call.1} parent=11 // pred_region
          _
        $region20: #{tpu_custom_call.1} parent=11 // pred_fallthru
          _
        // Predicated region
        $region21: #{tpu_custom_call.1} parent=11 // pred_check
          %p259 = pneg %p107
        $region22: #{tpu_custom_call.1} parent=11 // pred_check_branch
          %261 = sbr.rel (%p259) target = $region24
        $region23: #{tpu_custom_call.1} parent=11 // pred_region
          _
        $region24: #{tpu_custom_call.1} parent=11 // pred_fallthru
          _
        // Predicated region
        $region25: #{tpu_custom_call.1} parent=11 // pred_check
          %p262 = pneg %p128
        $region26: #{tpu_custom_call.1} parent=11 // pred_check_branch
          %264 = sbr.rel (%p262) target = $region28
        $region27: #{tpu_custom_call.1} parent=11 // pred_region
          _
        $region28: #{tpu_custom_call.1} parent=11 // pred_fallthru
          _
        // Predicated region
        $region29: #{tpu_custom_call.1} parent=11 // pred_check
          %p265 = pneg %p149
        $region30: #{tpu_custom_call.1} parent=11 // pred_check_branch
          %267 = sbr.rel (%p265) target = $region32
        $region31: #{tpu_custom_call.1} parent=11 // pred_region
          _
        $region32: #{tpu_custom_call.1} parent=11 // pred_fallthru
          _
        // Predicated region
        $region33: #{tpu_custom_call.1} parent=11 // pred_check
          %p268 = pneg %p170
        $region34: #{tpu_custom_call.1} parent=11 // pred_check_branch
          %270 = sbr.rel (%p268) target = $region36
        $region35: #{tpu_custom_call.1} parent=11 // pred_region
          _
        $region36: #{tpu_custom_call.1} parent=11 // pred_fallthru
          _
        // Predicated region
        $region37: #{tpu_custom_call.1} parent=11 // pred_check
          %p271 = pneg %p191
        $region38: #{tpu_custom_call.1} parent=11 // pred_check_branch
          %273 = sbr.rel (%p271) target = $region40
        $region39: #{tpu_custom_call.1} parent=11 // pred_region
          _
        $region40: #{tpu_custom_call.1} parent=11 // pred_fallthru
          _
        // Predicated region
        $region41: #{tpu_custom_call.1} parent=11 // pred_check
          %p274 = pneg %p212
        $region42: #{tpu_custom_call.1} parent=11 // pred_check_branch
          %276 = sbr.rel (%p274) target = $region44
        $region43: #{tpu_custom_call.1} parent=11 // pred_region
          _
        $region44: #{tpu_custom_call.1} parent=11 // pred_fallthru
          _
      $region12: #{tpu_custom_call.1} parent=5 // pred_fallthru
        _
      %p277 = scmp.lt.s32.totalorder %s18, 2
      // Predicated region
      $region45: #{tpu_custom_call.1} parent=5 // pred_check
        %p278 = pneg %p277
      $region46: #{tpu_custom_call.1} parent=5 // pred_check_branch
        %280 = sbr.rel (%p278) target = $region48
      $region47: #{tpu_custom_call.1} parent=5 // pred_region
        // Predicated region
        $region49: #{tpu_custom_call.1} parent=47 // pred_check
          %p281 = pneg %p38
        $region50: #{tpu_custom_call.1} parent=47 // pred_check_branch
          %283 = sbr.rel (%p281) target = $region52
        $region51: #{tpu_custom_call.1} parent=47 // pred_region
          %p284 = scmp.lt.s32.totalorder %s18, 1
          %s285 = scalar_select %p284, %s18, 1
          %s286 = smul.addr %s285, 8
          %s287 = scalar_lea.vmem %s0, %s286
        $region52: #{tpu_custom_call.1} parent=47 // pred_fallthru
          _
      $region48: #{tpu_custom_call.1} parent=5 // pred_fallthru
        _
      %p288 = scmp.le.s32.totalorder 1, %s18
      %p289 = scmp.lt.s32.totalorder %s18, 3
      %p290 = pnand %p288, %p289
      %p291 = pneg %p290
      // Predicated region
      $region53: #{tpu_custom_call.1} parent=5 // pred_check
        _
      $region54: #{tpu_custom_call.1} parent=5 // pred_check_branch
        %293 = sbr.rel (%p290) target = $region56
      $region55: #{tpu_custom_call.1} parent=5 // pred_region
        %s294 = ssub.s32 %s18, 1
        %p295 = scmp.lt.s32.totalorder %s23, 1
        %s296 = scalar_select %p295, %s23, 1
        %s297 = smul.addr %s296, 8
        %s298 = scalar_lea.vmem %s0, %s297
        %p299 = pneg %p44
        %p300 = pneg %p41
        %p301 = pneg %p65
        %p302 = pneg %p62
        %p303 = pneg %p86
        %p304 = pneg %p83
        %p305 = pneg %p107
        %p306 = pneg %p104
        %p307 = pneg %p128
        %p308 = pneg %p125
        %p309 = pneg %p149
        %p310 = pneg %p146
        %p311 = pneg %p170
        %p312 = pneg %p167
        %p313 = pneg %p191
        %p314 = pneg %p188
        %p315 = pneg %p212
        %p316 = pneg %p209
        %p317 = pneg %p238
        %p318 = pneg %p235
        %s319 = sand.u32 %s225, 1
        %s320 = scalar_lea.sflag [#allocation3], %s319
        %s321 = sand.u32 %s225, 1
        %s322 = smul.addr %s321, 8
        %s323 = scalar_lea.vmem [#allocation2], %s322
        %p324 = scmp.lt.s32.totalorder %s23, 1
        %s325 = scalar_select %p324, %s23, 1
        %s326 = smul.addr %s325, 8
        %s327 = scalar_lea.vmem %s0, %s326
        %v329 = vld [vmem:[%s327] sm:$0xff]
        %v330 = vpack.c.bf16 %v329, %v329
        %v331 = vld [vmem:[%s1] sm:$0xf]
        %v332 = vld [vmem:[%s1 + $0x4] sm:$0xf]
        %v333 = vld [vmem:[%s1 + $0x8] sm:$0xf]
        %v334 = vld [vmem:[%s1 + $0xc] sm:$0xf]
        %v335 = vld [vmem:[%s2] sm:$0x1]
        %v337 = vperm.slane %v335, 0
        %v343 = vunpack.c.l.b16 %v331
        %v344 = vunpack.c.l.b16 %v332
        %v345 = vunpack.c.l.b16 %v333
        %v346 = vunpack.c.l.b16 %v334
        %v347 = vpack.c.b16 %v344, %v343
        %v348 = vpack.c.b16 %v346, %v345
        %vm351 = vcmask 261120
        %v353 = vsel %vm351, %v330, 0
        %355 = vmatpush.bf16.msra.mxu0 0
        %356 = vmatpush.bf16.msra.mxu0 0
        %357 = vmatpush.bf16.msra.mxu0 0
        %358 = vmatpush.bf16.msra.mxu0 0
        %359 = vmatpush.bf16.msra.mxu0 0
        %360 = vmatpush.bf16.msra.mxu0 0
        %361 = vmatpush.bf16.msra.mxu0 %v348
        %362 = vmatpush.bf16.msra.mxu0 %v347
        %363 = vmatmul.bf16.gmra.mxu0 %v353
        %v364 = vpop.f32.mrf.mxu0
        %v365 = vadd.f32 %v337, %v364
        %v366 = vpop.f32.mrf.mxu0
        %367 = vdwg.mxu0
        %v368 = vmax.f32 %v365, 0.0
        %v369 = vpack.c.bf16 %v368, %v368
        %v370 = vld [vmem:[%s3] sm:$0xf]
        %v371 = vld [vmem:[%s3 + $0x4] sm:$0xf]
        %v372 = vld [vmem:[%s3 + $0x8] sm:$0xf]
        %v373 = vld [vmem:[%s3 + $0xc] sm:$0xf]
        %v374 = vld [vmem:[%s3 + $0x10] sm:$0xf]
        %v375 = vld [vmem:[%s3 + $0x14] sm:$0xf]
        %v376 = vld [vmem:[%s3 + $0x18] sm:$0xf]
        %v377 = vld [vmem:[%s3 + $0x1c] sm:$0xf]
        %v378 = vld [vmem:[%s3 + $0x20] sm:$0xf]
        %v379 = vld [vmem:[%s3 + $0x24] sm:$0xf]
        %v380 = vld [vmem:[%s3 + $0x28] sm:$0xf]
        %v381 = vld [vmem:[%s3 + $0x2c] sm:$0xf]
        %v382 = vld [vmem:[%s3 + $0x30] sm:$0xf]
        %v383 = vld [vmem:[%s3 + $0x34] sm:$0xf]
        %v384 = vld [vmem:[%s3 + $0x38] sm:$0xf]
        %v385 = vld [vmem:[%s3 + $0x3c] sm:$0xf]
        %v386 = vld [vmem:[%s4] sm:$0x1]
        %v388 = vperm.slane %v386, 0
        %v406 = vunpack.c.l.b16 %v370
        %v407 = vunpack.c.l.b16 %v371
        %v408 = vunpack.c.l.b16 %v372
        %v409 = vunpack.c.l.b16 %v373
        %v410 = vunpack.c.l.b16 %v374
        %v411 = vunpack.c.l.b16 %v375
        %v412 = vunpack.c.l.b16 %v376
        %v413 = vunpack.c.l.b16 %v377
        %v414 = vunpack.c.l.b16 %v378
        %v415 = vunpack.c.l.b16 %v379
        %v416 = vunpack.c.l.b16 %v380
        %v417 = vunpack.c.l.b16 %v381
        %v418 = vunpack.c.l.b16 %v382
        %v419 = vunpack.c.l.b16 %v383
        %v420 = vunpack.c.l.b16 %v384
        %v421 = vunpack.c.l.b16 %v385
        %v422 = vpack.c.b16 %v407, %v406
        %v423 = vpack.c.b16 %v409, %v408
        %v424 = vpack.c.b16 %v411, %v410
        %v425 = vpack.c.b16 %v413, %v412
        %v426 = vpack.c.b16 %v415, %v414
        %v427 = vpack.c.b16 %v417, %v416
        %v428 = vpack.c.b16 %v419, %v418
        %v429 = vpack.c.b16 %v421, %v420
        %438 = vmatpush.bf16.msra.mxu0 %v429
        %439 = vmatpush.bf16.msra.mxu0 %v428
        %440 = vmatpush.bf16.msra.mxu0 %v427
        %441 = vmatpush.bf16.msra.mxu0 %v426
        %442 = vmatpush.bf16.msra.mxu0 %v425
        %443 = vmatpush.bf16.msra.mxu0 %v424
        %444 = vmatpush.bf16.msra.mxu0 %v423
        %445 = vmatpush.bf16.msra.mxu0 %v422
        %446 = vmatmul.bf16.gmra.mxu0 %v369
        %v447 = vpop.f32.mrf.mxu0
        %v448 = vadd.f32 %v388, %v447
        %v449 = vpop.f32.mrf.mxu0
        %450 = vdwg.mxu0
        %v451 = vadd.f32 %v329, %v448
        %v452 = vpack.c.bf16 %v451, %v451
        %v453 = vld [vmem:[%s5] sm:$0xf]
        %v454 = vld [vmem:[%s5 + $0x4] sm:$0xf]
        %v455 = vld [vmem:[%s5 + $0x8] sm:$0xf]
        %v456 = vld [vmem:[%s5 + $0xc] sm:$0xf]
        %v457 = vld [vmem:[%s6] sm:$0x1]
        %v459 = vperm.slane %v457, 0
        %v465 = vunpack.c.l.b16 %v453
        %v466 = vunpack.c.l.b16 %v454
        %v467 = vunpack.c.l.b16 %v455
        %v468 = vunpack.c.l.b16 %v456
        %v469 = vpack.c.b16 %v466, %v465
        %v470 = vpack.c.b16 %v468, %v467
        %v474 = vsel %vm351, %v452, 0
        %476 = vmatpush.bf16.msra.mxu0 0
        %477 = vmatpush.bf16.msra.mxu0 0
        %478 = vmatpush.bf16.msra.mxu0 0
        %479 = vmatpush.bf16.msra.mxu0 0
        %480 = vmatpush.bf16.msra.mxu0 0
        %481 = vmatpush.bf16.msra.mxu0 0
        %482 = vmatpush.bf16.msra.mxu0 %v470
        %483 = vmatpush.bf16.msra.mxu0 %v469
        %484 = vmatmul.bf16.gmra.mxu0 %v474
        %v485 = vpop.f32.mrf.mxu0
        %v486 = vadd.f32 %v459, %v485
        %v487 = vpop.f32.mrf.mxu0
        %488 = vdwg.mxu0
        %v489 = vmax.f32 %v486, 0.0
        %v490 = vpack.c.bf16 %v489, %v489
        %v491 = vld [vmem:[%s7] sm:$0xf]
        %v492 = vld [vmem:[%s7 + $0x4] sm:$0xf]
        %v493 = vld [vmem:[%s7 + $0x8] sm:$0xf]
        %v494 = vld [vmem:[%s7 + $0xc] sm:$0xf]
        %v495 = vld [vmem:[%s7 + $0x10] sm:$0xf]
        %v496 = vld [vmem:[%s7 + $0x14] sm:$0xf]
        %v497 = vld [vmem:[%s7 + $0x18] sm:$0xf]
        %v498 = vld [vmem:[%s7 + $0x1c] sm:$0xf]
        %v499 = vld [vmem:[%s7 + $0x20] sm:$0xf]
        %v500 = vld [vmem:[%s7 + $0x24] sm:$0xf]
        %v501 = vld [vmem:[%s7 + $0x28] sm:$0xf]
        %v502 = vld [vmem:[%s7 + $0x2c] sm:$0xf]
        %v503 = vld [vmem:[%s7 + $0x30] sm:$0xf]
        %v504 = vld [vmem:[%s7 + $0x34] sm:$0xf]
        %v505 = vld [vmem:[%s7 + $0x38] sm:$0xf]
        %v506 = vld [vmem:[%s7 + $0x3c] sm:$0xf]
        %v507 = vld [vmem:[%s8] sm:$0x1]
        %v509 = vperm.slane %v507, 0
        %v527 = vunpack.c.l.b16 %v491
        %v528 = vunpack.c.l.b16 %v492
        %v529 = vunpack.c.l.b16 %v493
        %v530 = vunpack.c.l.b16 %v494
        %v531 = vunpack.c.l.b16 %v495
        %v532 = vunpack.c.l.b16 %v496
        %v533 = vunpack.c.l.b16 %v497
        %v534 = vunpack.c.l.b16 %v498
        %v535 = vunpack.c.l.b16 %v499
        %v536 = vunpack.c.l.b16 %v500
        %v537 = vunpack.c.l.b16 %v501
        %v538 = vunpack.c.l.b16 %v502
        %v539 = vunpack.c.l.b16 %v503
        %v540 = vunpack.c.l.b16 %v504
        %v541 = vunpack.c.l.b16 %v505
        %v542 = vunpack.c.l.b16 %v506
        %v543 = vpack.c.b16 %v528, %v527
        %v544 = vpack.c.b16 %v530, %v529
        %v545 = vpack.c.b16 %v532, %v531
        %v546 = vpack.c.b16 %v534, %v533
        %v547 = vpack.c.b16 %v536, %v535
        %v548 = vpack.c.b16 %v538, %v537
        %v549 = vpack.c.b16 %v540, %v539
        %v550 = vpack.c.b16 %v542, %v541
        %559 = vmatpush.bf16.msra.mxu0 %v550
        %560 = vmatpush.bf16.msra.mxu0 %v549
        %561 = vmatpush.bf16.msra.mxu0 %v548
        %562 = vmatpush.bf16.msra.mxu0 %v547
        %563 = vmatpush.bf16.msra.mxu0 %v546
        %564 = vmatpush.bf16.msra.mxu0 %v545
        %565 = vmatpush.bf16.msra.mxu0 %v544
        %566 = vmatpush.bf16.msra.mxu0 %v543
        %567 = vmatmul.bf16.gmra.mxu0 %v490
        %v568 = vpop.f32.mrf.mxu0
        %v569 = vadd.f32 %v509, %v568
        %v570 = vpop.f32.mrf.mxu0
        %571 = vdwg.mxu0
        %v572 = vadd.f32 %v451, %v569
        %573 = vst.msk [vmem:[%s323] sm:$0xff] %vm351, %v572
        %s574 = sand.u32 %s225, 1
        %s575 = scalar_lea.sflag [#allocation3], %s574
        %s576 = sand.u32 %s225, 1
        %s577 = smul.addr %s576, 8
        %s578 = scalar_lea.vmem [#allocation2], %s577
        // Predicated region
        $region57: #{tpu_custom_call.1} parent=55 // pred_check
          %p579 = pneg %p235
        $region58: #{tpu_custom_call.1} parent=55 // pred_check_branch
          %581 = sbr.rel (%p579) target = $region60
        $region59: #{tpu_custom_call.1} parent=55 // pred_region
          %583 = vsyncadd %s575, 0
          %s584 = smul.addr %s23, 8
          %s585 = scalar_lea.hbm %s9, %s584
          %s587 = sshll.u32 %s578, 4
          %s588 = int_to_ptr.vmem [resolvable:$true] %s587
          %s589 = sshll.u32 %s585, 4
          %s590 = int_to_ptr.hbm [resolvable:$true] %s589
          %592 = dma.vmem_to_hbm [thread:$0]  %s588, 128, %s590, %s575
        $region60: #{tpu_custom_call.1} parent=55 // pred_fallthru
          _
      $region56: #{tpu_custom_call.1} parent=5 // pred_fallthru
        _
      %p593 = scmp.le.s32.totalorder 2, %s18
      // Predicated region
      $region61: #{tpu_custom_call.1} parent=5 // pred_check
        %p594 = pneg %p593
      $region62: #{tpu_custom_call.1} parent=5 // pred_check_branch
        %596 = sbr.rel (%p594) target = $region64
      $region63: #{tpu_custom_call.1} parent=5 // pred_region
        %s597 = ssub.s32 %s18, 2
        // Predicated region
        $region65: #{tpu_custom_call.1} parent=63 // pred_check
          %p598 = pneg %p241
        $region66: #{tpu_custom_call.1} parent=63 // pred_check_branch
          %600 = sbr.rel (%p598) target = $region68
        $region67: #{tpu_custom_call.1} parent=63 // pred_region
          %s601 = sand.u32 %s226, 1
          %s602 = scalar_lea.sflag [#allocation3], %s601
          %s603 = sand.u32 %s226, 1
          %s604 = smul.addr %s603, 8
          %s605 = scalar_lea.vmem [#allocation2], %s604
          %607 = dma.done %s602, 128
        $region68: #{tpu_custom_call.1} parent=63 // pred_fallthru
          _
      $region64: #{tpu_custom_call.1} parent=5 // pred_fallthru
        _
    $region6: #{tpu_custom_call.1} parent=1 // loop_footer
      %s22 = sadd.s32 1, %s18
    $region7: #{tpu_custom_call.1} parent=1 // loop_footer_branch
      %17 = sbr.rel target = $region3
    $region8: #{tpu_custom_call.1} parent=1 // loop_exit
      _
    %608 = vsyncpa [#allocation3], 1
    %s609 = scalar_lea.sflag [#allocation3], 1
    %610 = vsyncpa %s609, 1

</llo_original>
